<compile_context>
chip_gen: v7x
topology: tpu7x:2x2x1
jax: 0.10.0
libtpu: 0.0.40
codegen_flags: <defaults>
</compile_context>

<pallas_src>
import math

import jax
import jax.numpy as jnp
from jax.experimental import pallas as pl
from jax.experimental.pallas import tpu as pltpu


def _memcpy_kernel(x_hbm, o_hbm, sem):
    # Single full-array HBM->HBM DMA: no VMEM staging, no tiling, no padding.
    cp = pltpu.make_async_copy(x_hbm, o_hbm, sem)
    cp.start()
    cp.wait()


def flatten_layer(x):
    """Equivalent of PyTorch FlattenLayer.forward: x.view(x.shape[0], -1).

    NOTE: `jnp.reshape(x, (n, -1))` alone already gives the exact semantics
    (row-major, matching torch .view on a contiguous tensor) with zero data
    movement; the pallas_call below is an explicit bandwidth-optimal identity
    copy kept only as the required kernel / fusion stub.
    """
    n = x.shape[0]
    feat = math.prod(x.shape[1:]) if x.ndim > 1 else 1

    # Metadata-only flatten (row-major), matching PyTorch .view semantics.
    x2d = jnp.reshape(x, (n, feat))

    # Identity copy as one direct HBM->HBM DMA over the whole (contiguous) array.
    out = pl.pallas_call(
        _memcpy_kernel,
        out_shape=jax.ShapeDtypeStruct((n, feat), x.dtype),
        in_specs=[pl.BlockSpec(memory_space=pl.ANY)],
        out_specs=pl.BlockSpec(memory_space=pl.ANY),
        scratch_shapes=[pltpu.SemaphoreType.DMA(())],
    )(x2d)
    return out


if __name__ == "__main__":
    key = jax.random.PRNGKey(0)
    # Small conv-style NCHW input consistent with typical use of FlattenLayer.
    x = jax.random.normal(key, (2, 4, 16, 16), dtype=jnp.float32)

    y = jax.block_until_ready(flatten_layer(x))

    # Reference: PyTorch x.view(x.shape[0], -1) == row-major flatten per batch.
    y_ref = jnp.reshape(x, (x.shape[0], -1))

    assert y.shape == (2, 4 * 16 * 16), y.shape
    assert y.dtype == x.dtype
    assert jnp.array_equal(y, y_ref)

    print("KERNEL_OK")
</pallas_src>

<mosaic_0001>
module attributes {stable_mosaic.version = 11 : i64} {
  func.func @_memcpy_kernel(%arg0: memref<2x1024xf32, #tpu.memory_space<any>>, %arg1: memref<2x1024xf32, #tpu.memory_space<any>>, %arg2: memref<!tpu.dma_semaphore, #tpu.memory_space<semaphore_mem>>) attributes {dimension_semantics = [], scalar_prefetch = 0 : i64, scratch_operands = 1 : i64, tpu.core_type = #tpu.core_type<tc>} {
    tpu.enqueue_dma source(%arg0 : memref<2x1024xf32, #tpu.memory_space<any>>) target(%arg1 : memref<2x1024xf32, #tpu.memory_space<any>>) target_semaphore(%arg2 : memref<!tpu.dma_semaphore, #tpu.memory_space<semaphore_mem>>)
    tpu.wait_dma2 semaphore(%arg2 : memref<!tpu.dma_semaphore, #tpu.memory_space<semaphore_mem>>) src(%arg0 : memref<2x1024xf32, #tpu.memory_space<any>>) dst(%arg1 : memref<2x1024xf32, #tpu.memory_space<any>>)
    return
  }
}

</mosaic_0001>

<llo_original>
// kernel: tpu_custom_call.1
$region0: #{tpu_custom_call.1}
  #allocation0 [shape = 'u32[]', space=smem, size = 0x4, offset = 0x4, fixed_abs, tag = 'smem constant byte address 0x4 - core index']
  #allocation1 [shape = 'u32[144,128]{1,0:T(1,128)}', space=vmem, size = 0x12000, scoped, tag = 'internal scratch']
  #allocation2 [shape = 's32[1]{0}', space=sflag, size = 0x4, scoped, tag = 'scratch operand']
  #allocation3 [shape = 's32[]', space=sflag, size = 0x4, offset = 0, fixed_abs, tag = 'sflag constant byte address 0x0 - dummy sync flag']
  #allocation4 [shape = 'u32[0]{0}', space=smem, size = 0, offset = 0, fixed_abs, tag = 'smem constant byte address 0x0 - null']
  %s0 = inlined_call_operand.hbm [shape: f32[2,1024], index: 0, kind: input, shape index: {}]
  %s1 = inlined_call_operand.hbm [shape: f32[2,1024], index: 1, kind: output, shape index: {}]
  %s2 = sld [smem:[#allocation0]]
  $region2: #{tpu_custom_call.1} parent=0
    _
  %s4 = ssub.s32 1, %s2
  %s5 = scalar_select 0, %s4, %s2
  %s7 = sshll.u32 1, 14
  %s8 = sxor.u32 4294967295, %s7
  %s11 = sshll.u32 3, 24
  %s12 = sxor.u32 4294967295, %s11
  %s13 = sand.u32 0, %s12
  %s15 = sor.u32 %s13, 0
  %18 = dma.general %s0, 256, %s1, [#allocation2], [#allocation3], [#allocation4], %s15, 0
  %s19 = smul.u32 2, 1
  %s20 = smul.u32 %s19, 8
  %s21 = sshll.u32 %s20, 4
  %22 = dma.done [#allocation2], %s21
  %23 = vsyncmov [#allocation2]
  %s24 = vpop.sfrf %23
  %p25 = scmp.eq.s32.totalorder %s24, 0
  %p26 = pneg %p25
  %28 = shalt.err (%p26)

</llo_original>
